<compile_context>
chip_gen: v6e
topology: v6e:2x2x1
jax: 0.10.0
libtpu: 0.0.40
codegen_flags: <defaults>
</compile_context>

<pallas_src>
import functools
import math

import numpy as np
import jax
import jax.numpy as jnp
from jax import lax
from jax.experimental import pallas as pl
from jax.experimental.pallas import tpu as pltpu

_LANE = 128     # samples processed per inner-loop row (vreg lane width)
_OUT_SUB = 8    # output tile sublane height -> dense (8, lanes) stores


def _hist1d_kernel(x_ref, o_ref, acc_ref, *, delta, vmin, bins_sub, sub_rows,
                   comp_const):
    """One grid step: accumulate sub_rows * 128 samples of one (batch, split).

    x_ref  : (sub_rows, 128) f32 -- samples, lane-major.
    o_ref  : (8, bins_sub)   f32 -- 8 identical rows of the raw histogram.
    acc_ref: (bins_sub, 128) f32 -- persistent accumulator (bins on sublanes,
                                    128 partial-sum columns on lanes).
    """
    k = pl.program_id(1)

    @pl.when(k == 0)
    def _init():
        acc_ref[...] = jnp.zeros_like(acc_ref)

    # Bin centers: bins on sublanes, replicated across the 128 sample lanes.
    # Generated in-kernel (no centers input / DMA) and hoisted out of the loop.
    bin_idx = lax.broadcasted_iota(jnp.int32, (bins_sub, _LANE), 0)
    centers = vmin + delta * (bin_idx.astype(jnp.float32) + 0.5)

    # 4 VPU ops per (bin-vreg, row): sub, abs, min, add.
    def body(j, partial):
        xrow = x_ref[pl.ds(j, 1), :]                          # (1, 128)
        d = jnp.abs(xrow - centers)                           # (bins_sub, 128)
        return partial + jnp.minimum(d, delta)

    # No unrolling: centers(13) + partial(13) + per-iter temps(~14) stays well
    # inside the 64-vreg file; unroll=2 risks spills onto the vst slot.
    partial = lax.fori_loop(0, sub_rows, body,
                            jnp.zeros((bins_sub, _LANE), jnp.float32))

    # Per-step complement: sum_rows relu(delta - d) == C - sum_rows min(d, delta)
    # with C the exact f32 left-fold of sub_rows copies of delta, so padded
    # samples (d > delta for every center) cancel exactly.
    acc_ref[...] += comp_const - partial

    @pl.when(k == pl.num_programs(1) - 1)
    def _finalize():
        # Reduce over the 128 partial-sum lanes and move bins from sublanes to
        # lanes in one small MXU matmul: (8,128) x (bins_sub,128) contracted
        # along the lane axis -> (8, bins_sub) with 8 identical rows.
        ones = jnp.ones((_OUT_SUB, _LANE), jnp.float32)
        counts = lax.dot_general(ones, acc_ref[...], (((1,), (1,)), ((), ())),
                                 preferred_element_type=jnp.float32)
        o_ref[...] = counts.astype(o_ref.dtype)


def histogram1d(x, bins=100, vmin=0.0, vmax=1.0, norm=True, sub_rows=1024,
                splits=None):
    """Pallas TPU implementation of Histogram1D.forward.

    x: (B, N) float.  Returns (B, bins) float32.
    """
    B, N = x.shape
    delta = float(vmax - vmin) / float(bins)
    bins_sub = ((bins + 7) // 8) * 8          # compute-side bin padding (sublanes)

    # Keep both v7x TensorCores busy when B is small/odd by splitting each
    # batch row's samples into 2 independent partial histograms (summed in the
    # wrapper).  Near-neutral on single-TC v5e/v6e.
    if splits is None:
        splits = 2 if (B % 2 == 1) else 1

    # Tile the sample axis: rows of 128 samples, `sub` rows per grid step.
    rows = max(1, math.ceil(N / _LANE))
    rows_per_split = math.ceil(rows / splits)
    sub_rows = max(8, ((int(sub_rows) + 7) // 8) * 8)      # multiple of 8
    sub = min(sub_rows, ((rows_per_split + 7) // 8) * 8)
    tps = math.ceil(rows_per_split / sub)                  # tiles per (b, split)
    rows_pad = splits * tps * sub
    n_pad = rows_pad * _LANE

    # Pad samples with a value more than `delta` away from every (real or
    # padded) bin center so padding contributes exactly zero.  Skip the extra
    # HBM roundtrip when no padding is needed.
    pad_val = float(vmin) - 2.0 * delta
    xf = x.astype(jnp.float32)
    if n_pad == N:
        x2 = xf.reshape(B * rows_pad, _LANE)
    else:
        x2 = jnp.pad(xf, ((0, 0), (0, n_pad - N)),
                     constant_values=pad_val).reshape(B * rows_pad, _LANE)

    # Trace-time complement constant: exact f32 left-fold of `sub` deltas,
    # matching the kernel's accumulation order -> padded rows cancel exactly.
    d32 = np.float32(delta)
    c32 = np.float32(0.0)
    for _ in range(sub):
        c32 = np.float32(c32 + d32)
    comp_const = float(c32)

    kernel = functools.partial(
        _hist1d_kernel, delta=delta, vmin=float(vmin), bins_sub=bins_sub,
        sub_rows=sub, comp_const=comp_const)

    cost = pl.CostEstimate(
        flops=4 * B * n_pad * bins_sub,
        transcendentals=0,
        bytes_accessed=4 * (B * n_pad + B * splits * _OUT_SUB * bins_sub))

    out = pl.pallas_call(
        kernel,
        out_shape=jax.ShapeDtypeStruct((B * splits * _OUT_SUB, bins_sub),
                                       jnp.float32),
        grid_spec=pltpu.PrefetchScalarGridSpec(
            num_scalar_prefetch=0,
            grid=(B * splits, tps),
            in_specs=[pl.BlockSpec((sub, _LANE),
                                   lambda v, k: (v * tps + k, 0))],
            out_specs=pl.BlockSpec((_OUT_SUB, bins_sub), lambda v, k: (v, 0)),
            scratch_shapes=[pltpu.VMEM((bins_sub, _LANE), jnp.float32)]),
        compiler_params=pltpu.CompilerParams(
            dimension_semantics=("parallel", "arbitrary")),
        cost_estimate=cost,
    )(x2)

    # Drop replicated output sublanes and padded bins, merge splits, normalize.
    counts = out.reshape(B, splits, _OUT_SUB, bins_sub)[:, :, 0, :bins]
    counts = counts.sum(axis=1)
    if norm:
        counts = counts / (counts.sum(axis=1, keepdims=True) + 1e-5)
    return counts


def _reference(x, bins=100, vmin=0.0, vmax=1.0, norm=True):
    """Pure-JAX reference mirroring the PyTorch loop, for verification."""
    delta = float(vmax - vmin) / float(bins)
    centers = float(vmin) + delta * (jnp.arange(bins, dtype=jnp.float32) + 0.5)
    dist = jnp.abs(x[:, :, None] - centers[None, None, :])      # (B, N, bins)
    out = jnp.maximum(delta - dist, 0.0).sum(axis=1)            # (B, bins)
    if norm:
        summ = out.sum(axis=1, keepdims=True) + 1e-5
        out = out / summ
    return out


if __name__ == "__main__":
    key = jax.random.PRNGKey(0)
    B, N, BINS = 2, 64, 100
    x = jax.random.uniform(key, (B, N), dtype=jnp.float32, minval=0.0, maxval=1.0)

    out = histogram1d(x, bins=BINS, vmin=0.0, vmax=1.0, norm=True)
    out = jax.block_until_ready(out)
    ref = _reference(x, bins=BINS, vmin=0.0, vmax=1.0, norm=True)
    assert out.shape == (B, BINS)
    assert jnp.allclose(out, ref, atol=2e-5, rtol=1e-5), "mismatch vs reference"

    # Also exercise the small-batch path (B=1 -> 2-way sample split).
    x1 = x[:1]
    out1 = jax.block_until_ready(histogram1d(x1, bins=BINS, norm=True))
    ref1 = _reference(x1, bins=BINS, norm=True)
    assert out1.shape == (1, BINS)
    assert jnp.allclose(out1, ref1, atol=2e-5, rtol=1e-5), "mismatch (B=1 split path)"

    print("KERNEL_OK")
</pallas_src>

<mosaic_0001>
module attributes {stable_mosaic.version = 11 : i64} {
  func.func @_hist1d_kernel(%arg0: i32, %arg1: i32, %arg2: memref<8x128xf32, #tpu.memory_space<vmem>>, %arg3: memref<8x104xf32, #tpu.memory_space<vmem>>, %arg4: memref<104x128xf32, #tpu.memory_space<vmem>>) attributes {dimension_semantics = [#tpu.dimension_semantics<parallel>, #tpu.dimension_semantics<arbitrary>], iteration_bounds = array<i64: 2, 1>, scalar_prefetch = 0 : i64, scratch_operands = 1 : i64, tpu.core_type = #tpu.core_type<tc>, window_params = [{transform_indices = @transform_0, window_bounds = array<i64: 8, 128>}, {transform_indices = @transform_1, window_bounds = array<i64: 8, 104>}]} {
    %c0_i32 = arith.constant 0 : i32
    %0 = arith.cmpi eq, %arg1, %c0_i32 : i32
    %1 = arith.extui %0 : i1 to i32
    %c0_i32_0 = arith.constant 0 : i32
    %2 = arith.cmpi ne, %1, %c0_i32_0 : i32
    scf.if %2 {
      %cst_12 = arith.constant 0.000000e+00 : f32
      %22 = vector.broadcast %cst_12 : f32 to vector<104x128xf32>
      %c0_13 = arith.constant 0 : index
      %c0_14 = arith.constant 0 : index
      %23 = vector.load %arg4[%c0_13, %c0_14] : memref<104x128xf32, #tpu.memory_space<vmem>>, vector<104x128xf32>
      tpu.vector_store %arg4[%c0_13, %c0_14], %22 {strides = array<i32>} : memref<104x128xf32, #tpu.memory_space<vmem>>, vector<104x128xf32>,
    } else {
    }
    %3 = tpu.iota {dimensions = array<i32: 0>} : vector<104x128xi32>
    %4 = arith.sitofp %3 : vector<104x128xi32> to vector<104x128xf32>
    %cst = arith.constant 5.000000e-01 : f32
    %5 = vector.broadcast %cst : f32 to vector<104x128xf32>
    %6 = arith.addf %4, %5 : vector<104x128xf32>
    %cst_1 = arith.constant 0.00999999977 : f32
    %7 = vector.broadcast %cst_1 : f32 to vector<104x128xf32>
    %8 = arith.mulf %7, %6 : vector<104x128xf32>
    %cst_2 = arith.constant 0.000000e+00 : f32
    %9 = vector.broadcast %cst_2 : f32 to vector<104x128xf32>
    %10 = arith.addf %9, %8 : vector<104x128xf32>
    %cst_3 = arith.constant 0.000000e+00 : f32
    %11 = vector.broadcast %cst_3 : f32 to vector<104x128xf32>
    %c0_i32_4 = arith.constant 0 : i32
    %c8_i32 = arith.constant 8 : i32
    %12 = arith.addi %c0_i32_4, %c8_i32 : i32
    %c1_i32 = arith.constant 1 : i32
    %13 = scf.for %arg5 = %c0_i32_4 to %12 step %c1_i32 iter_args(%arg6 = %11) -> (vector<104x128xf32>)  : i32 {
      %22 = arith.index_cast %arg5 : i32 to index
      %c0_12 = arith.constant 0 : index
      %23 = vector.load %arg2[%22, %c0_12] : memref<8x128xf32, #tpu.memory_space<vmem>>, vector<1x128xf32>
      %24 = vector.broadcast %23 : vector<1x128xf32> to vector<104x128xf32>
      %25 = arith.subf %24, %10 : vector<104x128xf32>
      %26 = math.absf %25 : vector<104x128xf32>
      %cst_13 = arith.constant 0.00999999977 : f32
      %27 = vector.broadcast %cst_13 : f32 to vector<104x128xf32>
      %28 = arith.minimumf %26, %27 : vector<104x128xf32>
      %29 = arith.addf %arg6, %28 : vector<104x128xf32>
      scf.yield %29 : vector<104x128xf32>
    }
    %c8_i32_5 = arith.constant 8 : i32
    %c0 = arith.constant 0 : index
    %c0_6 = arith.constant 0 : index
    %14 = vector.load %arg4[%c0, %c0_6] : memref<104x128xf32, #tpu.memory_space<vmem>>, vector<104x128xf32>
    %cst_7 = arith.constant 0.0799999907 : f32
    %15 = vector.broadcast %cst_7 : f32 to vector<104x128xf32>
    %16 = arith.subf %15, %13 : vector<104x128xf32>
    %17 = arith.addf %14, %16 : vector<104x128xf32>
    %c0_8 = arith.constant 0 : index
    %c0_9 = arith.constant 0 : index
    %18 = vector.load %arg4[%c0_8, %c0_9] : memref<104x128xf32, #tpu.memory_space<vmem>>, vector<104x128xf32>
    tpu.vector_store %arg4[%c0_8, %c0_9], %17 {strides = array<i32>} : memref<104x128xf32, #tpu.memory_space<vmem>>, vector<104x128xf32>,
    %c0_i32_10 = arith.constant 0 : i32
    %19 = arith.cmpi eq, %arg1, %c0_i32_10 : i32
    %20 = arith.extui %19 : i1 to i32
    %c0_i32_11 = arith.constant 0 : i32
    %21 = arith.cmpi ne, %20, %c0_i32_11 : i32
    scf.if %21 {
      %cst_12 = arith.constant 1.000000e+00 : f32
      %22 = vector.broadcast %cst_12 : f32 to vector<8x128xf32>
      %c0_13 = arith.constant 0 : index
      %c0_14 = arith.constant 0 : index
      %23 = vector.load %arg4[%c0_13, %c0_14] : memref<104x128xf32, #tpu.memory_space<vmem>>, vector<104x128xf32>
      %cst_15 = arith.constant dense<0.000000e+00> : vector<8x104xf32>
      %24 = tpu.matmul %22, %23, %cst_15 {dimension_numbers = #tpu.dot_dimension_numbers<[1], [1], [0], [0], [0, 0, 1, 0], [], []>} : vector<8x128xf32>, vector<104x128xf32>, vector<8x104xf32> -> vector<8x104xf32>
      %c0_16 = arith.constant 0 : index
      %c0_17 = arith.constant 0 : index
      %25 = vector.load %arg3[%c0_16, %c0_17] : memref<8x104xf32, #tpu.memory_space<vmem>>, vector<8x104xf32>
      tpu.vector_store %arg3[%c0_16, %c0_17], %24 {strides = array<i32>} : memref<8x104xf32, #tpu.memory_space<vmem>>, vector<8x104xf32>,
    } else {
    }
    return
  }
  func.func @transform_0(%arg0: i32, %arg1: i32) -> (i32, i32) {
    %c1_i32 = arith.constant 1 : i32
    %0 = arith.muli %arg0, %c1_i32 : i32
    %1 = arith.addi %0, %arg1 : i32
    %c0_i32 = arith.constant 0 : i32
    %c0_i32_0 = arith.constant 0 : i32
    return %1, %c0_i32 : i32, i32
  }
  func.func @transform_1(%arg0: i32, %arg1: i32) -> (i32, i32) {
    %c0_i32 = arith.constant 0 : i32
    %c0_i32_0 = arith.constant 0 : i32
    return %arg0, %c0_i32 : i32, i32
  }
}

</mosaic_0001>

<llo_original>
// kernel: tpu_custom_call.1
$region0: #{tpu_custom_call.1}
  #allocation0 [shape = 'u32[]', space=smem, size = 0x4, offset = 0x4, fixed_abs, tag = 'smem constant byte address 0x4 - core index']
  #allocation1 [shape = 'u32[144,128]{1,0:T(1,128)}', space=vmem, size = 0x12000, scoped, tag = 'internal scratch']
  #allocation2 [shape = 'f32[104,128]{1,0:T(8,128)}', space=vmem, size = 0xd000, scoped, tag = 'scratch operand']
  %s0 = inlined_call_operand.hbm [shape: f32[16,128], index: 0, kind: input, shape index: {}]
  %s1 = inlined_call_operand.hbm [shape: f32[16,104], index: 1, kind: output, shape index: {}]
  %s2 = sld [smem:[#allocation0]]
  $region56: #{tpu_custom_call.1} parent=0
    _
  %s4 = ssub.s32 1, %s2
  %s5 = scalar_select 0, %s4, %s2
  $region1: #{tpu_custom_call.1} parent=0
    #allocation3 [shape = 'u8[8192]{0}', space=vmem, size = 0x2000, scoped, tag = 'input window, operand 0']
    #allocation4 [shape = 's32[2]{0}', space=sflag, size = 0x8, scoped, tag = 'scoped memory for tpu_custom_call.1']
    #allocation5 [shape = 's32[2]{0}', space=sflag, size = 0x8, scoped, tag = 'scoped memory for tpu_custom_call.1']
    #allocation6 [shape = 'u8[8192]{0}', space=vmem, size = 0x2000, scoped, tag = 'output window, operand 0']
    %6 = vsyncpa [#allocation4], 0
    %s7 = scalar_lea.sflag [#allocation4], 1
    %8 = vsyncpa %s7, 0
    %9 = vsyncpa [#allocation5], 0
    %s10 = scalar_lea.sflag [#allocation5], 1
    %11 = vsyncpa %s10, 0
    loop: start=0, step=1, limit=4
    $region2: #{tpu_custom_call.1} parent=1 // loop_pre_header
      _
    $region3: #{tpu_custom_call.1} parent=1 // loop_header
      %s13 = sphi 0, %s17
      %p14 = scmp.ge.s32.totalorder %s13, 4
      %s20 = sphi 0, %s32
      %s21 = sphi 0, %s28
      %s22 = sphi 0, %s20
      %s23 = sphi 0, %s21
      %s24 = sphi 0, %s22
      %s25 = sphi 0, %s23
      %s37 = sphi 0, %s39
      %s40 = sphi 0, %s37
      %s41 = sphi 0, %s40
      %s57 = sphi 0, %s41
      %s63 = sphi 0, %s65
      %s66 = sphi 0, %s63
      %s67 = sphi 0, %s66
      %s83 = sphi 0, %s67
    $region4: #{tpu_custom_call.1} parent=1 // loop_header_branch
      %16 = sbr.rel (%p14) target = $region8
    $region5: #{tpu_custom_call.1} parent=1 // loop_body
      %s18 = ssub.s32 %s13, 1
      %s19 = ssub.s32 %s13, 2
      %s26 = sadd.s32 1, %s21
      %p27 = scmp.ge.s32.totalorder %s26, 1
      %s28 = scalar_select %p27, 0, %s26
      %s29 = sadd.s32 1, %s20
      %s30 = scalar_select %p27, %s29, %s20
      %p31 = scmp.ge.s32.totalorder %s30, 2
      %s32 = scalar_select %p31, 0, %s30
      %s33 = sadd.s32 %s20, %s21
      %s34 = sadd.s32 %s32, %s28
      %s35 = ssub.s32 %s33, %s34
      %p36 = scmp.eq.s32.totalorder %s35, 0
      %s38 = sadd.s32 %s37, 1
      %s39 = scalar_select %p36, %s37, %s38
      %p42 = pneg %p36
      %p43 = scmp.eq.s32.totalorder %s13, 1
      %p44 = por %p42, %p43
      %p45 = scmp.ne.s32.totalorder %s37, %s40
      %p46 = scmp.eq.s32.totalorder %s13, 0
      %p47 = por %p45, %p46
      %p48 = scmp.ne.s32.totalorder %s37, %s40
      %p49 = scmp.eq.s32.totalorder %s18, 1
      %p50 = por %p48, %p49
      %p51 = scmp.ne.s32.totalorder %s40, %s41
      %p52 = scmp.eq.s32.totalorder %s18, 0
      %p53 = por %p51, %p52
      %p54 = scmp.ne.s32.totalorder %s40, %s41
      %p55 = scmp.eq.s32.totalorder %s19, 1
      %p56 = por %p54, %p55
      %p58 = scmp.ne.s32.totalorder %s41, %s57
      %p59 = scmp.eq.s32.totalorder %s19, 0
      %p60 = por %p58, %p59
      %s61 = ssub.s32 %s20, %s32
      %p62 = scmp.eq.s32.totalorder %s61, 0
      %s64 = sadd.s32 %s63, 1
      %s65 = scalar_select %p62, %s63, %s64
      %p68 = pneg %p62
      %p69 = scmp.eq.s32.totalorder %s13, 1
      %p70 = por %p68, %p69
      %p71 = scmp.ne.s32.totalorder %s63, %s66
      %p72 = scmp.eq.s32.totalorder %s13, 0
      %p73 = por %p71, %p72
      %p74 = scmp.ne.s32.totalorder %s63, %s66
      %p75 = scmp.eq.s32.totalorder %s18, 1
      %p76 = por %p74, %p75
      %p77 = scmp.ne.s32.totalorder %s66, %s67
      %p78 = scmp.eq.s32.totalorder %s18, 0
      %p79 = por %p77, %p78
      %p80 = scmp.ne.s32.totalorder %s66, %s67
      %p81 = scmp.eq.s32.totalorder %s19, 1
      %p82 = por %p80, %p81
      %p84 = scmp.ne.s32.totalorder %s67, %s83
      %p85 = scmp.eq.s32.totalorder %s19, 0
      %p86 = por %p84, %p85
      %p87 = scmp.le.s32.totalorder 1, %s13
      %p88 = scmp.lt.s32.totalorder %s13, 3
      %p89 = pnand %p87, %p88
      %p90 = pneg %p89
      // Predicated region
      $region9: #{tpu_custom_call.1} parent=5 // pred_check
        _
      $region10: #{tpu_custom_call.1} parent=5 // pred_check_branch
        %92 = sbr.rel (%p89) target = $region12
      $region11: #{tpu_custom_call.1} parent=5 // pred_region
        %s93 = ssub.s32 %s13, 1
      $region12: #{tpu_custom_call.1} parent=5 // pred_fallthru
        _
      %p94 = scmp.lt.s32.totalorder %s13, 2
      // Predicated region
      $region13: #{tpu_custom_call.1} parent=5 // pred_check
        %p95 = pneg %p94
      $region14: #{tpu_custom_call.1} parent=5 // pred_check_branch
        %97 = sbr.rel (%p95) target = $region16
      $region15: #{tpu_custom_call.1} parent=5 // pred_region
        // Predicated region
        $region17: #{tpu_custom_call.1} parent=15 // pred_check
          %p98 = pneg %p47
        $region18: #{tpu_custom_call.1} parent=15 // pred_check_branch
          %100 = sbr.rel (%p98) target = $region20
        $region19: #{tpu_custom_call.1} parent=15 // pred_region
          %s101 = sand.u32 %s37, 1
          %s102 = scalar_lea.sflag [#allocation4], %s101
          %s103 = sand.u32 %s37, 1
          %s104 = smul.addr %s103, 8
          %s105 = scalar_lea.vmem [#allocation3], %s104
          %s106 = sadd.s32 %s20, %s21
          %s108 = ssub.s32 128, 128
          %109 = vsyncadd %s102, %s108
          %s110 = smul.addr %s106, 128
          %s111 = scalar_lea.hbm %s0, %s110
          %s113 = sshll.u32 %s105, 4
          %s114 = int_to_ptr.vmem [resolvable:$true] %s113
          %116 = dma.hbm_to_vmem [thread:$0]  %s111, 128, %s114, %s102
        $region20: #{tpu_custom_call.1} parent=15 // pred_fallthru
          _
      $region16: #{tpu_custom_call.1} parent=5 // pred_fallthru
        _
      %p117 = scmp.le.s32.totalorder 1, %s13
      %p118 = scmp.lt.s32.totalorder %s13, 3
      %p119 = pnand %p117, %p118
      %p120 = pneg %p119
      // Predicated region
      $region21: #{tpu_custom_call.1} parent=5 // pred_check
        _
      $region22: #{tpu_custom_call.1} parent=5 // pred_check_branch
        %122 = sbr.rel (%p119) target = $region24
      $region23: #{tpu_custom_call.1} parent=5 // pred_region
        %s123 = ssub.s32 %s13, 1
        %s124 = sand.u32 %s40, 1
        %s125 = scalar_lea.sflag [#allocation4], %s124
        %s126 = sand.u32 %s40, 1
        %s127 = smul.addr %s126, 8
        %s128 = scalar_lea.vmem [#allocation3], %s127
        // Predicated region
        $region25: #{tpu_custom_call.1} parent=23 // pred_check
          %p129 = pneg %p53
        $region26: #{tpu_custom_call.1} parent=23 // pred_check_branch
          %131 = sbr.rel (%p129) target = $region28
        $region27: #{tpu_custom_call.1} parent=23 // pred_region
          %132 = dma.done %s125, 128
        $region28: #{tpu_custom_call.1} parent=23 // pred_fallthru
          _
        %s133 = sand.u32 %s40, 1
        %s134 = scalar_lea.sflag [#allocation4], %s133
        %s135 = sand.u32 %s40, 1
        %s136 = smul.addr %s135, 8
        %s137 = scalar_lea.vmem [#allocation3], %s136
        %p138 = pneg %p53
        %p139 = pneg %p50
        %p140 = pneg %p79
        %p141 = pneg %p76
        %s142 = sand.u32 %s66, 1
        %s143 = scalar_lea.sflag [#allocation5], %s142
        %s144 = sand.u32 %s66, 1
        %s145 = smul.addr %s144, 8
        %s146 = scalar_lea.vmem [#allocation6], %s145
        %s147 = sadd.s32 %s22, %s23
        %p148 = scmp.eq.s32.totalorder %s23, 0
        // Predicated region
        $region29: #{tpu_custom_call.1} parent=23 // pred_check
          %p149 = pneg %p148
        $region30: #{tpu_custom_call.1} parent=23 // pred_check_branch
          %151 = sbr.rel (%p149) target = $region32
        $region31: #{tpu_custom_call.1} parent=23 // pred_region
          %152 = vst [vmem:[#allocation2] sm:$0xff] 0.0
          %153 = vst [vmem:[#allocation2 + $0x8] sm:$0xff] 0.0
          %154 = vst [vmem:[#allocation2 + $0x10] sm:$0xff] 0.0
          %155 = vst [vmem:[#allocation2 + $0x18] sm:$0xff] 0.0
          %156 = vst [vmem:[#allocation2 + $0x20] sm:$0xff] 0.0
          %157 = vst [vmem:[#allocation2 + $0x28] sm:$0xff] 0.0
          %158 = vst [vmem:[#allocation2 + $0x30] sm:$0xff] 0.0
          %159 = vst [vmem:[#allocation2 + $0x38] sm:$0xff] 0.0
          %160 = vst [vmem:[#allocation2 + $0x40] sm:$0xff] 0.0
          %161 = vst [vmem:[#allocation2 + $0x48] sm:$0xff] 0.0
          %162 = vst [vmem:[#allocation2 + $0x50] sm:$0xff] 0.0
          %163 = vst [vmem:[#allocation2 + $0x58] sm:$0xff] 0.0
          %164 = vst [vmem:[#allocation2 + $0x60] sm:$0xff] 0.0
        $region32: #{tpu_custom_call.1} parent=23 // pred_fallthru
          _
        %v165 = vlaneseq
        %v166 = vshrl.u32 %v165, 7
        %v167 = vadd.s32 %v166, 8
        %v168 = vadd.s32 %v166, 16
        %v169 = vadd.s32 %v166, 24
        %v170 = vadd.s32 %v166, 32
        %v171 = vadd.s32 %v166, 40
        %v172 = vadd.s32 %v166, 48
        %v173 = vadd.s32 %v166, 56
        %v174 = vadd.s32 %v166, 64
        %v175 = vadd.s32 %v166, 72
        %v176 = vadd.s32 %v166, 80
        %v177 = vadd.s32 %v166, 88
        %v178 = vadd.s32 %v166, 96
        %v179 = vcvt.s32.f32 %v166
        %v180 = vcvt.s32.f32 %v167
        %v181 = vcvt.s32.f32 %v168
        %v182 = vcvt.s32.f32 %v169
        %v183 = vcvt.s32.f32 %v170
        %v184 = vcvt.s32.f32 %v171
        %v185 = vcvt.s32.f32 %v172
        %v186 = vcvt.s32.f32 %v173
        %v187 = vcvt.s32.f32 %v174
        %v188 = vcvt.s32.f32 %v175
        %v189 = vcvt.s32.f32 %v176
        %v190 = vcvt.s32.f32 %v177
        %v191 = vcvt.s32.f32 %v178
        %v192 = vadd.f32 %v179, 0.5
        %v193 = vadd.f32 %v180, 0.5
        %v194 = vadd.f32 %v181, 0.5
        %v195 = vadd.f32 %v182, 0.5
        %v196 = vadd.f32 %v183, 0.5
        %v197 = vadd.f32 %v184, 0.5
        %v198 = vadd.f32 %v185, 0.5
        %v199 = vadd.f32 %v186, 0.5
        %v200 = vadd.f32 %v187, 0.5
        %v201 = vadd.f32 %v188, 0.5
        %v202 = vadd.f32 %v189, 0.5
        %v203 = vadd.f32 %v190, 0.5
        %v204 = vadd.f32 %v191, 0.5
        %v205 = vmul.f32 %v192, 0.01
        %v206 = vmul.f32 %v193, 0.01
        %v207 = vmul.f32 %v194, 0.01
        %v208 = vmul.f32 %v195, 0.01
        %v209 = vmul.f32 %v196, 0.01
        %v210 = vmul.f32 %v197, 0.01
        %v211 = vmul.f32 %v198, 0.01
        %v212 = vmul.f32 %v199, 0.01
        %v213 = vmul.f32 %v200, 0.01
        %v214 = vmul.f32 %v201, 0.01
        %v215 = vmul.f32 %v202, 0.01
        %v216 = vmul.f32 %v203, 0.01
        %v217 = vmul.f32 %v204, 0.01
        %v218 = vadd.f32 %v205, 0.0
        %v219 = vadd.f32 %v206, 0.0
        %v220 = vadd.f32 %v207, 0.0
        %v221 = vadd.f32 %v208, 0.0
        %v222 = vadd.f32 %v209, 0.0
        %v223 = vadd.f32 %v210, 0.0
        %v224 = vadd.f32 %v211, 0.0
        %v225 = vadd.f32 %v212, 0.0
        %v226 = vadd.f32 %v213, 0.0
        %v227 = vadd.f32 %v214, 0.0
        %v228 = vadd.f32 %v215, 0.0
        %v229 = vadd.f32 %v216, 0.0
        %v230 = vadd.f32 %v217, 0.0
        loop: start=0, step=1, limit=8
        $region33: #{tpu_custom_call.1} parent=23 // loop_pre_header
          _
        $region34: #{tpu_custom_call.1} parent=23 // loop_header
          %s232 = sphi 0, %s236
          %p233 = scmp.ge.s32.totalorder %s232, 8
          %v237 = vphi 0.0, %v295
          %v238 = vphi 0.0, %v296
          %v239 = vphi 0.0, %v297
          %v240 = vphi 0.0, %v298
          %v241 = vphi 0.0, %v299
          %v242 = vphi 0.0, %v300
          %v243 = vphi 0.0, %v301
          %v244 = vphi 0.0, %v302
          %v245 = vphi 0.0, %v303
          %v246 = vphi 0.0, %v304
          %v247 = vphi 0.0, %v305
          %v248 = vphi 0.0, %v306
          %v249 = vphi 0.0, %v307
        $region35: #{tpu_custom_call.1} parent=23 // loop_header_branch
          %235 = sbr.rel (%p233) target = $region39
        $region36: #{tpu_custom_call.1} parent=23 // loop_body
          %s250 = scalar_lea.vmem %s128, %s232 [#allocation3]
          %v251 = vld [vmem:[%s250] sm:$0x1]
          %v252 = vlaneseq
          %v253 = vshrl.u32 %v252, 7
          %v254 = vsub.s32 0, %v253
          %v255 = vrot.slane %v251, %v254
          %v256 = vsub.f32 %v255, %v218
          %v257 = vsub.f32 %v255, %v219
          %v258 = vsub.f32 %v255, %v220
          %v259 = vsub.f32 %v255, %v221
          %v260 = vsub.f32 %v255, %v222
          %v261 = vsub.f32 %v255, %v223
          %v262 = vsub.f32 %v255, %v224
          %v263 = vsub.f32 %v255, %v225
          %v264 = vsub.f32 %v255, %v226
          %v265 = vsub.f32 %v255, %v227
          %v266 = vsub.f32 %v255, %v228
          %v267 = vsub.f32 %v255, %v229
          %v268 = vsub.f32 %v255, %v230
          %v269 = vand.u32 2147483647, %v256
          %v270 = vand.u32 2147483647, %v257
          %v271 = vand.u32 2147483647, %v258
          %v272 = vand.u32 2147483647, %v259
          %v273 = vand.u32 2147483647, %v260
          %v274 = vand.u32 2147483647, %v261
          %v275 = vand.u32 2147483647, %v262
          %v276 = vand.u32 2147483647, %v263
          %v277 = vand.u32 2147483647, %v264
          %v278 = vand.u32 2147483647, %v265
          %v279 = vand.u32 2147483647, %v266
          %v280 = vand.u32 2147483647, %v267
          %v281 = vand.u32 2147483647, %v268
          %v282 = vmin.f32 %v269, 0.01
          %v283 = vmin.f32 %v270, 0.01
          %v284 = vmin.f32 %v271, 0.01
          %v285 = vmin.f32 %v272, 0.01
          %v286 = vmin.f32 %v273, 0.01
          %v287 = vmin.f32 %v274, 0.01
          %v288 = vmin.f32 %v275, 0.01
          %v289 = vmin.f32 %v276, 0.01
          %v290 = vmin.f32 %v277, 0.01
          %v291 = vmin.f32 %v278, 0.01
          %v292 = vmin.f32 %v279, 0.01
          %v293 = vmin.f32 %v280, 0.01
          %v294 = vmin.f32 %v281, 0.01
          %v295 = vadd.f32 %v237, %v282
          %v296 = vadd.f32 %v238, %v283
          %v297 = vadd.f32 %v239, %v284
          %v298 = vadd.f32 %v240, %v285
          %v299 = vadd.f32 %v241, %v286
          %v300 = vadd.f32 %v242, %v287
          %v301 = vadd.f32 %v243, %v288
          %v302 = vadd.f32 %v244, %v289
          %v303 = vadd.f32 %v245, %v290
          %v304 = vadd.f32 %v246, %v291
          %v305 = vadd.f32 %v247, %v292
          %v306 = vadd.f32 %v248, %v293
          %v307 = vadd.f32 %v249, %v294
        $region37: #{tpu_custom_call.1} parent=23 // loop_footer
          %s236 = sadd.s32 1, %s232
        $region38: #{tpu_custom_call.1} parent=23 // loop_footer_branch
          %231 = sbr.rel target = $region34
        $region39: #{tpu_custom_call.1} parent=23 // loop_exit
          _
        %v308 = vld [vmem:[#allocation2] sm:$0xff]
        %v309 = vld [vmem:[#allocation2 + $0x8] sm:$0xff]
        %v310 = vld [vmem:[#allocation2 + $0x10] sm:$0xff]
        %v311 = vld [vmem:[#allocation2 + $0x18] sm:$0xff]
        %v312 = vld [vmem:[#allocation2 + $0x20] sm:$0xff]
        %v313 = vld [vmem:[#allocation2 + $0x28] sm:$0xff]
        %v314 = vld [vmem:[#allocation2 + $0x30] sm:$0xff]
        %v315 = vld [vmem:[#allocation2 + $0x38] sm:$0xff]
        %v316 = vld [vmem:[#allocation2 + $0x40] sm:$0xff]
        %v317 = vld [vmem:[#allocation2 + $0x48] sm:$0xff]
        %v318 = vld [vmem:[#allocation2 + $0x50] sm:$0xff]
        %v319 = vld [vmem:[#allocation2 + $0x58] sm:$0xff]
        %v320 = vld [vmem:[#allocation2 + $0x60] sm:$0xff]
        %v321 = vsub.f32 0.07999999, %v237
        %v322 = vsub.f32 0.07999999, %v238
        %v323 = vsub.f32 0.07999999, %v239
        %v324 = vsub.f32 0.07999999, %v240
        %v325 = vsub.f32 0.07999999, %v241
        %v326 = vsub.f32 0.07999999, %v242
        %v327 = vsub.f32 0.07999999, %v243
        %v328 = vsub.f32 0.07999999, %v244
        %v329 = vsub.f32 0.07999999, %v245
        %v330 = vsub.f32 0.07999999, %v246
        %v331 = vsub.f32 0.07999999, %v247
        %v332 = vsub.f32 0.07999999, %v248
        %v333 = vsub.f32 0.07999999, %v249
        %v334 = vadd.f32 %v308, %v321
        %v335 = vadd.f32 %v309, %v322
        %v336 = vadd.f32 %v310, %v323
        %v337 = vadd.f32 %v311, %v324
        %v338 = vadd.f32 %v312, %v325
        %v339 = vadd.f32 %v313, %v326
        %v340 = vadd.f32 %v314, %v327
        %v341 = vadd.f32 %v315, %v328
        %v342 = vadd.f32 %v316, %v329
        %v343 = vadd.f32 %v317, %v330
        %v344 = vadd.f32 %v318, %v331
        %v345 = vadd.f32 %v319, %v332
        %v346 = vadd.f32 %v320, %v333
        %347 = vst [vmem:[#allocation2] sm:$0xff] %v334
        %348 = vst [vmem:[#allocation2 + $0x8] sm:$0xff] %v335
        %349 = vst [vmem:[#allocation2 + $0x10] sm:$0xff] %v336
        %350 = vst [vmem:[#allocation2 + $0x18] sm:$0xff] %v337
        %351 = vst [vmem:[#allocation2 + $0x20] sm:$0xff] %v338
        %352 = vst [vmem:[#allocation2 + $0x28] sm:$0xff] %v339
        %353 = vst [vmem:[#allocation2 + $0x30] sm:$0xff] %v340
        %354 = vst [vmem:[#allocation2 + $0x38] sm:$0xff] %v341
        %355 = vst [vmem:[#allocation2 + $0x40] sm:$0xff] %v342
        %356 = vst [vmem:[#allocation2 + $0x48] sm:$0xff] %v343
        %357 = vst [vmem:[#allocation2 + $0x50] sm:$0xff] %v344
        %358 = vst [vmem:[#allocation2 + $0x58] sm:$0xff] %v345
        %359 = vst [vmem:[#allocation2 + $0x60] sm:$0xff] %v346
        // Predicated region
        $region40: #{tpu_custom_call.1} parent=23 // pred_check
          %p360 = pneg %p148
        $region41: #{tpu_custom_call.1} parent=23 // pred_check_branch
          %362 = sbr.rel (%p360) target = $region43
        $region42: #{tpu_custom_call.1} parent=23 // pred_region
          %v363 = vld [vmem:[#allocation2] sm:$0xff]
          %v364 = vld [vmem:[#allocation2 + $0x8] sm:$0xff]
          %v365 = vld [vmem:[#allocation2 + $0x10] sm:$0xff]
          %v366 = vld [vmem:[#allocation2 + $0x18] sm:$0xff]
          %v367 = vld [vmem:[#allocation2 + $0x20] sm:$0xff]
          %v368 = vld [vmem:[#allocation2 + $0x28] sm:$0xff]
          %v369 = vld [vmem:[#allocation2 + $0x30] sm:$0xff]
          %v370 = vld [vmem:[#allocation2 + $0x38] sm:$0xff]
          %v371 = vld [vmem:[#allocation2 + $0x40] sm:$0xff]
          %v372 = vld [vmem:[#allocation2 + $0x48] sm:$0xff]
          %v373 = vld [vmem:[#allocation2 + $0x50] sm:$0xff]
          %v374 = vld [vmem:[#allocation2 + $0x58] sm:$0xff]
          %v375 = vld [vmem:[#allocation2 + $0x60] sm:$0xff]
          %376 = vmatprep.subr.mxu0 0.0
          %377 = vmatpush1.xpose.msra.mxu0 0.0
          %378 = vmatprep.subr.mxu0 0.0
          %379 = vmatpush1.xpose.msra.mxu0 0.0
          %380 = vmatprep.subr.mxu0 0.0
          %381 = vmatpush1.xpose.msra.mxu0 0.0
          %382 = vmatprep.subr.mxu0 0.0
          %383 = vmatpush1.xpose.msra.mxu0 %v375
          %384 = vmatprep.subr.mxu0 0.0
          %385 = vmatpush1.xpose.msra.mxu0 %v374
          %386 = vmatprep.subr.mxu0 0.0
          %387 = vmatpush1.xpose.msra.mxu0 %v373
          %388 = vmatprep.subr.mxu0 0.0
          %389 = vmatpush1.xpose.msra.mxu0 %v372
          %390 = vmatprep.subr.mxu0 0.0
          %391 = vmatpush1.xpose.msra.mxu0 %v371
          %392 = vmatprep.subr.mxu0 0.0
          %393 = vmatpush1.xpose.msra.mxu0 %v370
          %394 = vmatprep.subr.mxu0 0.0
          %395 = vmatpush1.xpose.msra.mxu0 %v369
          %396 = vmatprep.subr.mxu0 0.0
          %397 = vmatpush1.xpose.msra.mxu0 %v368
          %398 = vmatprep.subr.mxu0 0.0
          %399 = vmatpush1.xpose.msra.mxu0 %v367
          %400 = vmatprep.subr.mxu0 0.0
          %401 = vmatpush1.xpose.msra.mxu0 %v366
          %402 = vmatprep.subr.mxu0 0.0
          %403 = vmatpush1.xpose.msra.mxu0 %v365
          %404 = vmatprep.subr.mxu0 0.0
          %405 = vmatpush1.xpose.msra.mxu0 %v364
          %406 = vmatprep.subr.mxu0 0.0
          %407 = vmatpush1.xpose.msra.mxu0 %v363
          %408 = vmatprep.subr.mxu0 0.0
          %409 = vmatpush2.xpose.msra.mxu0 0.0
          %410 = vmatprep.subr.mxu0 0.0
          %411 = vmatpush2.xpose.msra.mxu0 0.0
          %412 = vmatprep.subr.mxu0 0.0
          %413 = vmatpush2.xpose.msra.mxu0 0.0
          %414 = vmatprep.subr.mxu0 0.0
          %415 = vmatpush2.xpose.msra.mxu0 0.0
          %416 = vmatprep.subr.mxu0 0.0
          %417 = vmatpush2.xpose.msra.mxu0 0.0
          %418 = vmatprep.subr.mxu0 0.0
          %419 = vmatpush2.xpose.msra.mxu0 0.0
          %420 = vmatprep.subr.mxu0 0.0
          %421 = vmatpush2.xpose.msra.mxu0 0.0
          %422 = vmatprep.subr.mxu0 0.0
          %423 = vmatpush2.xpose.msra.mxu0 0.0
          %424 = vmatprep.subr.mxu0 0.0
          %425 = vmatpush2.xpose.msra.mxu0 0.0
          %426 = vmatprep.subr.mxu0 0.0
          %427 = vmatpush2.xpose.msra.mxu0 0.0
          %428 = vmatprep.subr.mxu0 0.0
          %429 = vmatpush2.xpose.msra.mxu0 0.0
          %430 = vmatprep.subr.mxu0 0.0
          %431 = vmatpush2.xpose.msra.mxu0 0.0
          %432 = vmatprep.subr.mxu0 0.0
          %433 = vmatpush2.xpose.msra.mxu0 0.0
          %434 = vmatprep.subr.mxu0 0.0
          %435 = vmatpush2.xpose.msra.mxu0 0.0
          %436 = vmatprep.subr.mxu0 0.0
          %437 = vmatpush2.xpose.msra.mxu0 0.0
          %438 = vmatprep.subr.mxu0 0.0
          %439 = vmatpush2.xpose.msra.mxu0 0.0
          %440 = vmatprep.mubr.f32.mxu0 0.0
          %441 = vmatmul.mubr.f32.gmra.mxu0 1.0
          %v442 = vpop.f32.mrf.mxu0
          %v443 = vadd.f32 0.0, %v442
          %v444 = vpop.f32.mrf.mxu0
          %445 = vdwg.mxu0
          %vm446 = vcmask 850944
          %447 = vst.msk [vmem:[%s146] sm:$0xff] %vm446, %v443
        $region43: #{tpu_custom_call.1} parent=23 // pred_fallthru
          _
        %s448 = sand.u32 %s66, 1
        %s449 = scalar_lea.sflag [#allocation5], %s448
        %s450 = sand.u32 %s66, 1
        %s451 = smul.addr %s450, 8
        %s452 = scalar_lea.vmem [#allocation6], %s451
        // Predicated region
        $region44: #{tpu_custom_call.1} parent=23 // pred_check
          %p453 = pneg %p76
        $region45: #{tpu_custom_call.1} parent=23 // pred_check_branch
          %455 = sbr.rel (%p453) target = $region47
        $region46: #{tpu_custom_call.1} parent=23 // pred_region
          %s457 = ssub.s32 128, 128
          %458 = vsyncadd %s449, %s457
          %s459 = smul.addr %s22, 128
          %s460 = scalar_lea.hbm %s1, %s459
          %s462 = sshll.u32 %s452, 4
          %s463 = int_to_ptr.vmem [resolvable:$true] %s462
          %465 = dma.vmem_to_hbm [thread:$0]  %s463, 128, %s460, %s449
        $region47: #{tpu_custom_call.1} parent=23 // pred_fallthru
          _
      $region24: #{tpu_custom_call.1} parent=5 // pred_fallthru
        _
      %p466 = scmp.le.s32.totalorder 2, %s13
      // Predicated region
      $region48: #{tpu_custom_call.1} parent=5 // pred_check
        %p467 = pneg %p466
      $region49: #{tpu_custom_call.1} parent=5 // pred_check_branch
        %469 = sbr.rel (%p467) target = $region51
      $region50: #{tpu_custom_call.1} parent=5 // pred_region
        %s470 = ssub.s32 %s13, 2
        // Predicated region
        $region52: #{tpu_custom_call.1} parent=50 // pred_check
          %p471 = pneg %p82
        $region53: #{tpu_custom_call.1} parent=50 // pred_check_branch
          %473 = sbr.rel (%p471) target = $region55
        $region54: #{tpu_custom_call.1} parent=50 // pred_region
          %s474 = sand.u32 %s67, 1
          %s475 = scalar_lea.sflag [#allocation5], %s474
          %s476 = sand.u32 %s67, 1
          %s477 = smul.addr %s476, 8
          %s478 = scalar_lea.vmem [#allocation6], %s477
          %479 = dma.done %s475, 128
        $region55: #{tpu_custom_call.1} parent=50 // pred_fallthru
          _
      $region51: #{tpu_custom_call.1} parent=5 // pred_fallthru
        _
    $region6: #{tpu_custom_call.1} parent=1 // loop_footer
      %s17 = sadd.s32 1, %s13
    $region7: #{tpu_custom_call.1} parent=1 // loop_footer_branch
      %12 = sbr.rel target = $region3
    $region8: #{tpu_custom_call.1} parent=1 // loop_exit
      _
    %480 = vsyncpa [#allocation4], 1
    %s481 = scalar_lea.sflag [#allocation4], 1
    %482 = vsyncpa %s481, 1
    %483 = vsyncpa [#allocation5], 1
    %s484 = scalar_lea.sflag [#allocation5], 1
    %485 = vsyncpa %s484, 1

</llo_original>
